<compile_context>
chip_gen: v7x
topology: tpu7x:2x2x1
jax: 0.10.0
libtpu: 0.0.40
codegen_flags: <defaults>
</compile_context>

<pallas_src>
import functools

import jax
import jax.numpy as jnp
from jax.experimental import pallas as pl
from jax.experimental.pallas import tpu as pltpu


# ----------------------------- tiling helpers ------------------------------

def _round_up(x, m):
    return ((x + m - 1) // m) * m


def _choose_tile(dim, cap, align):
    """Pick (padded_dim, tile) for one matmul dimension.

    The dim is padded only to `align` (8 for sublanes, 128 for lanes).  The
    tile is the largest multiple of `align` <= cap whose padding waste stays
    under ~3% of the dim; if none exists we take the minimum-waste tile.
    This avoids streaming large zero-padding regions of adj from HBM.
    """
    cap = max(align, (cap // align) * align)
    dim_pad = _round_up(dim, align)
    if dim_pad <= cap:
        return dim_pad, dim_pad
    best_key, best_val = None, None
    for t in range(cap, align - 1, -align):
        padded = _round_up(dim_pad, t)
        waste = padded - dim_pad
        key = (waste, -t)
        if best_key is None or key < best_key:
            best_key, best_val = key, (padded, t)
        if waste * 32 <= dim_pad:          # <= ~3% waste: largest such tile
            return padded, t
    return best_val


def _pad2d(x, m_pad, n_pad):
    m, n = x.shape
    if m == m_pad and n == n_pad:
        return x
    return jnp.pad(x, ((0, m_pad - m), (0, n_pad - n)))


# ----------------------------- Pallas kernels ------------------------------

def _mm_kernel(a_ref, b_ref, o_ref, acc_ref, *, relu):
    """Tiled matmul with optional fused ReLU epilogue (no bias)."""
    k = pl.program_id(2)

    @pl.when(k == 0)
    def _init():
        acc_ref[...] = jnp.zeros_like(acc_ref)

    acc_ref[...] += jnp.dot(a_ref[...], b_ref[...],
                            preferred_element_type=jnp.float32)

    @pl.when(k == pl.num_programs(2) - 1)
    def _done():
        out = acc_ref[...]
        if relu:
            out = jnp.maximum(out, 0.0)
        o_ref[...] = out.astype(o_ref.dtype)


def _mm_bias_kernel(a_ref, b_ref, bias_ref, o_ref, acc_ref):
    """Tiled matmul with fused bias add (module never applies relu with bias)."""
    k = pl.program_id(2)

    @pl.when(k == 0)
    def _init():
        acc_ref[...] = jnp.zeros_like(acc_ref)

    acc_ref[...] += jnp.dot(a_ref[...], b_ref[...],
                            preferred_element_type=jnp.float32)

    @pl.when(k == pl.num_programs(2) - 1)
    def _done():
        o_ref[...] = (acc_ref[...] + bias_ref[...].astype(jnp.float32)
                      ).astype(o_ref.dtype)


# ----------------------------- matmul wrapper -------------------------------

def _tiled_matmul(a, b, bias=None, relu=False, out_dtype=None):
    """out = a @ b (+ bias | relu), tiled/pipelined Pallas matmul."""
    m, k = a.shape
    k2, n = b.shape
    assert k == k2, (a.shape, b.shape)
    out_dtype = a.dtype if out_dtype is None else out_dtype

    a_bytes = jnp.dtype(a.dtype).itemsize
    b_bytes = jnp.dtype(b.dtype).itemsize
    o_bytes = jnp.dtype(out_dtype).itemsize

    # Tile caps: large enough that per-tile DMA >> per-grid-step overhead.
    tm_cap = 1024
    tk_cap = 2048 if a_bytes <= 2 else 1024
    tn_cap = 512

    n_pad, tn = _choose_tile(n, tn_cap, 128)
    k_pad, tk = _choose_tile(k, tk_cap, 128)

    # Megacore (v7x): if the lane axis fits in one tile, split the row axis so
    # the parallel grid portion has >= 2 iterations (both TCs get work).
    m_pad8 = _round_up(m, 8)
    if n_pad == tn and m_pad8 >= 16:
        tm_cap = min(tm_cap, max(8, (m_pad8 // 16) * 8))
    m_pad, tm = _choose_tile(m, tm_cap, 8)

    a_p = _pad2d(a, m_pad, k_pad)
    b_p = _pad2d(b, k_pad, n_pad)

    grid = (m_pad // tm, n_pad // tn, k_pad // tk)
    a_spec = pl.BlockSpec((tm, tk), lambda i, j, kk: (i, kk))
    b_spec = pl.BlockSpec((tk, tn), lambda i, j, kk: (kk, j))
    o_spec = pl.BlockSpec((tm, tn), lambda i, j, kk: (i, j))
    scratch = [pltpu.VMEM((tm, tn), jnp.float32)]

    # Scoped-VMEM budget from the double-buffered tile footprint (+ slack);
    # stays well inside v7x's 64 MiB physical VMEM with the caps above.
    tile_bytes = tm * tk * a_bytes + tk * tn * b_bytes + tm * tn * o_bytes
    if bias is not None:
        tile_bytes += 8 * tn * jnp.dtype(bias.dtype).itemsize
    vmem_limit = int(min(2 * tile_bytes + tm * tn * 4 + (8 << 20), 64 << 20))

    cparams = pltpu.CompilerParams(
        dimension_semantics=("parallel", "parallel", "arbitrary"),
        vmem_limit_bytes=vmem_limit)
    out_shape = jax.ShapeDtypeStruct((m_pad, n_pad), out_dtype)

    if bias is not None:
        bias_p = jnp.pad(bias.reshape(1, n), ((0, 0), (0, n_pad - n)))
        bias_spec = pl.BlockSpec((1, tn), lambda i, j, kk: (0, j))
        out = pl.pallas_call(
            _mm_bias_kernel,
            out_shape=out_shape,
            grid_spec=pltpu.PrefetchScalarGridSpec(
                num_scalar_prefetch=0,
                grid=grid,
                in_specs=[a_spec, b_spec, bias_spec],
                out_specs=o_spec,
                scratch_shapes=scratch),
            compiler_params=cparams,
        )(a_p, b_p, bias_p)
    else:
        out = pl.pallas_call(
            functools.partial(_mm_kernel, relu=relu),
            out_shape=out_shape,
            grid_spec=pltpu.PrefetchScalarGridSpec(
                num_scalar_prefetch=0,
                grid=grid,
                in_specs=[a_spec, b_spec],
                out_specs=o_spec,
                scratch_shapes=scratch),
            compiler_params=cparams,
        )(a_p, b_p)

    if m_pad != m or n_pad != n:
        out = out[:m, :n]
    return out


# ------------------------------ GCN forward ---------------------------------

def graph_convolution(x, weight, adj=None, bias=None, relu=False,
                      adj_compute_dtype=jnp.bfloat16):
    """GraphConvolution.forward(x, adj, relu) with parameters (weight, bias).

    adj_compute_dtype: MXU input dtype for the memory-bound adjacency matmul
    (default bf16; accumulation is always f32 and the output keeps x.dtype).
    Pass None to run the adjacency matmul fully in the input dtype.
    """
    out_dtype = x.dtype
    f_in, f_out = weight.shape
    assert x.shape[-1] == f_in

    if adj is None:
        return _tiled_matmul(x, weight, bias=bias, relu=relu,
                             out_dtype=out_dtype)

    assert adj.shape == (x.shape[0], x.shape[0])
    adj_dt = adj.dtype if adj_compute_dtype is None else adj_compute_dtype

    # Pick the cheaper association for the dominant N^2 matmul.
    if f_out > f_in:
        # (adj @ x) @ W : N^2 term contracts over F_in (< F_out) columns.
        ax = _tiled_matmul(adj.astype(adj_dt), x.astype(adj_dt),
                           out_dtype=jnp.float32)
        return _tiled_matmul(ax, weight.astype(ax.dtype), bias=bias,
                             relu=relu, out_dtype=out_dtype)
    else:
        # adj @ (x @ W) : N^2 term produces only F_out (<= F_in) columns.
        support = _tiled_matmul(x, weight, out_dtype=jnp.float32)
        return _tiled_matmul(adj.astype(adj_dt), support.astype(adj_dt),
                             bias=bias, relu=relu, out_dtype=out_dtype)


# ------------------------- deterministic parameters --------------------------

def xavier_uniform(key, in_features, out_features, dtype=jnp.float32):
    bound = (6.0 / (in_features + out_features)) ** 0.5
    return jax.random.uniform(key, (in_features, out_features),
                              minval=-bound, maxval=bound, dtype=dtype)


# ---------------------------------- demo ------------------------------------

if __name__ == "__main__":
    key = jax.random.PRNGKey(0)
    k_x, k_adj, k_w, k_b, k_x2, k_adj2, k_w2 = jax.random.split(key, 7)

    # --- small case ----------------------------------------------------------
    N, F_IN, F_OUT = 16, 32, 64
    x = jax.random.normal(k_x, (N, F_IN), dtype=jnp.float32)
    a = (jax.random.uniform(k_adj, (N, N)) > 0.6).astype(jnp.float32)
    adj = a + a.T + jnp.eye(N, dtype=jnp.float32)
    adj = adj / jnp.sum(adj, axis=-1, keepdims=True)
    weight = xavier_uniform(k_w, F_IN, F_OUT)
    bias = jax.random.normal(k_b, (F_OUT,), dtype=jnp.float32)

    ref_support = x @ weight
    ref_relu = jnp.maximum(adj @ ref_support, 0.0)
    ref_bias = adj @ ref_support + bias

    # forward(x, adj, relu=True) -- pure-f32 adjacency matmul
    out_f32 = jax.block_until_ready(
        graph_convolution(x, weight, adj=adj, relu=True,
                          adj_compute_dtype=None))
    assert out_f32.shape == (N, F_OUT)
    assert jnp.allclose(out_f32, ref_relu, atol=1e-3, rtol=1e-3)

    # forward(x, adj, relu=True) -- default bf16 adjacency matmul (f32 acc)
    out_bf = jax.block_until_ready(
        graph_convolution(x, weight, adj=adj, relu=True))
    assert out_bf.dtype == jnp.float32
    assert jnp.allclose(out_bf, ref_relu, atol=5e-2, rtol=5e-2)

    # forward(x)  (adj=None, relu=False)
    out_plain = jax.block_until_ready(graph_convolution(x, weight))
    assert out_plain.shape == (N, F_OUT)
    assert jnp.allclose(out_plain, ref_support, atol=1e-3, rtol=1e-3)

    # forward(x, adj) with bias (module ignores relu when bias is set)
    out_b = jax.block_until_ready(
        graph_convolution(x, weight, adj=adj, bias=bias, relu=True,
                          adj_compute_dtype=None))
    assert jnp.allclose(out_b, ref_bias, atol=1e-3, rtol=1e-3)

    # --- medium case: exercises multi-tile grid, (8,128) padding, and the
    #     megacore >= 2-parallel-iteration split ------------------------------
    N2, F_IN2, F_OUT2 = 300, 96, 160
    x2 = jax.random.normal(k_x2, (N2, F_IN2), dtype=jnp.float32)
    a2 = (jax.random.uniform(k_adj2, (N2, N2)) > 0.6).astype(jnp.float32)
    adj2 = a2 + a2.T + jnp.eye(N2, dtype=jnp.float32)
    adj2 = adj2 / jnp.sum(adj2, axis=-1, keepdims=True)
    w2 = xavier_uniform(k_w2, F_IN2, F_OUT2)

    ref2 = jnp.maximum(adj2 @ (x2 @ w2), 0.0)
    out2 = jax.block_until_ready(
        graph_convolution(x2, w2, adj=adj2, relu=True))
    assert out2.shape == (N2, F_OUT2)
    assert jnp.allclose(out2, ref2, atol=5e-3, rtol=5e-2)

    print("KERNEL_OK")
</pallas_src>

<mosaic_0001>
module attributes {stable_mosaic.version = 11 : i64} {
  func.func @_mm_kernel(%arg0: i32, %arg1: i32, %arg2: i32, %arg3: memref<8x128xf32, #tpu.memory_space<vmem>>, %arg4: memref<128x128xf32, #tpu.memory_space<vmem>>, %arg5: memref<8x128xf32, #tpu.memory_space<vmem>>, %arg6: memref<8x128xf32, #tpu.memory_space<vmem>>) attributes {dimension_semantics = [#tpu.dimension_semantics<parallel>, #tpu.dimension_semantics<parallel>, #tpu.dimension_semantics<arbitrary>], iteration_bounds = array<i64: 2, 1, 1>, scalar_prefetch = 0 : i64, scratch_operands = 1 : i64, tpu.core_type = #tpu.core_type<tc>, window_params = [{transform_indices = @transform_0, window_bounds = array<i64: 8, 128>}, {transform_indices = @transform_1, window_bounds = array<i64: 128, 128>}, {transform_indices = @transform_2, window_bounds = array<i64: 8, 128>}]} {
    %c0_i32 = arith.constant 0 : i32
    %0 = arith.cmpi eq, %arg2, %c0_i32 : i32
    %1 = arith.extui %0 : i1 to i32
    %c0_i32_0 = arith.constant 0 : i32
    %2 = arith.cmpi ne, %1, %c0_i32_0 : i32
    scf.if %2 {
      %cst_10 = arith.constant 0.000000e+00 : f32
      %12 = vector.broadcast %cst_10 : f32 to vector<8x128xf32>
      %c0_11 = arith.constant 0 : index
      %c0_12 = arith.constant 0 : index
      %13 = vector.load %arg6[%c0_11, %c0_12] : memref<8x128xf32, #tpu.memory_space<vmem>>, vector<8x128xf32>
      tpu.vector_store %arg6[%c0_11, %c0_12], %12 {strides = array<i32>} : memref<8x128xf32, #tpu.memory_space<vmem>>, vector<8x128xf32>,
    } else {
    }
    %c0 = arith.constant 0 : index
    %c0_1 = arith.constant 0 : index
    %3 = vector.load %arg6[%c0, %c0_1] : memref<8x128xf32, #tpu.memory_space<vmem>>, vector<8x128xf32>
    %c0_2 = arith.constant 0 : index
    %c0_3 = arith.constant 0 : index
    %4 = vector.load %arg3[%c0_2, %c0_3] : memref<8x128xf32, #tpu.memory_space<vmem>>, vector<8x128xf32>
    %c0_4 = arith.constant 0 : index
    %c0_5 = arith.constant 0 : index
    %5 = vector.load %arg4[%c0_4, %c0_5] : memref<128x128xf32, #tpu.memory_space<vmem>>, vector<128x128xf32>
    %cst = arith.constant dense<0.000000e+00> : vector<8x128xf32>
    %6 = tpu.matmul %4, %5, %cst {dimension_numbers = #tpu.dot_dimension_numbers<[1], [0], [0], [1], [0, 0, 1, 1], [], []>} : vector<8x128xf32>, vector<128x128xf32>, vector<8x128xf32> -> vector<8x128xf32>
    %7 = arith.addf %3, %6 : vector<8x128xf32>
    %c0_6 = arith.constant 0 : index
    %c0_7 = arith.constant 0 : index
    %8 = vector.load %arg6[%c0_6, %c0_7] : memref<8x128xf32, #tpu.memory_space<vmem>>, vector<8x128xf32>
    tpu.vector_store %arg6[%c0_6, %c0_7], %7 {strides = array<i32>} : memref<8x128xf32, #tpu.memory_space<vmem>>, vector<8x128xf32>,
    %c0_i32_8 = arith.constant 0 : i32
    %9 = arith.cmpi eq, %arg2, %c0_i32_8 : i32
    %10 = arith.extui %9 : i1 to i32
    %c0_i32_9 = arith.constant 0 : i32
    %11 = arith.cmpi ne, %10, %c0_i32_9 : i32
    scf.if %11 {
      %c0_10 = arith.constant 0 : index
      %c0_11 = arith.constant 0 : index
      %12 = vector.load %arg6[%c0_10, %c0_11] : memref<8x128xf32, #tpu.memory_space<vmem>>, vector<8x128xf32>
      %c0_12 = arith.constant 0 : index
      %c0_13 = arith.constant 0 : index
      %13 = vector.load %arg5[%c0_12, %c0_13] : memref<8x128xf32, #tpu.memory_space<vmem>>, vector<8x128xf32>
      tpu.vector_store %arg5[%c0_12, %c0_13], %12 {strides = array<i32>} : memref<8x128xf32, #tpu.memory_space<vmem>>, vector<8x128xf32>,
    } else {
    }
    return
  }
  func.func @transform_0(%arg0: i32, %arg1: i32, %arg2: i32) -> (i32, i32) {
    %c0_i32 = arith.constant 0 : i32
    return %arg0, %arg2 : i32, i32
  }
  func.func @transform_1(%arg0: i32, %arg1: i32, %arg2: i32) -> (i32, i32) {
    %c0_i32 = arith.constant 0 : i32
    return %arg2, %arg1 : i32, i32
  }
  func.func @transform_2(%arg0: i32, %arg1: i32, %arg2: i32) -> (i32, i32) {
    %c0_i32 = arith.constant 0 : i32
    return %arg0, %arg1 : i32, i32
  }
}

</mosaic_0001>

<llo_original>
// kernel: tpu_custom_call.1
$region0: #{tpu_custom_call.1}
  #allocation0 [shape = 'u32[]', space=smem, size = 0x4, offset = 0x4, fixed_abs, tag = 'smem constant byte address 0x4 - core index']
  #allocation1 [shape = 'u32[144,128]{1,0:T(1,128)}', space=vmem, size = 0x12000, scoped, tag = 'internal scratch']
  #allocation2 [shape = 'f32[8,128]{1,0:T(8,128)}', space=vmem, size = 0x1000, scoped, tag = 'scratch operand']
  %s0 = inlined_call_operand.hbm [shape: f32[16,128], index: 0, kind: input, shape index: {}]
  %s1 = inlined_call_operand.hbm [shape: f32[128,128], index: 1, kind: input, shape index: {}]
  %s2 = inlined_call_operand.hbm [shape: f32[16,128], index: 2, kind: output, shape index: {}]
  %s3 = sld [smem:[#allocation0]]
  $region57: #{tpu_custom_call.1} parent=0
    _
  %s5 = ssub.s32 1, %s3
  %s6 = scalar_select 0, %s5, %s3
  $region1: #{tpu_custom_call.1} parent=0
    #allocation3 [shape = 'u8[8192]{0}', space=vmem, size = 0x2000, scoped, tag = 'input window, operand 0']
    #allocation4 [shape = 's32[2]{0}', space=sflag, size = 0x8, scoped, tag = 'scoped memory for tpu_custom_call.1']
    #allocation5 [shape = 's32[2]{0}', space=sflag, size = 0x8, scoped, tag = 'scoped memory for tpu_custom_call.1']
    #allocation6 [shape = 'u8[65536]{0}', space=vmem, size = 0x10000, scoped, tag = 'input window, operand 1, single buffered']
    #allocation7 [shape = 's32[1]{0}', space=sflag, size = 0x4, scoped, tag = 'scoped memory for tpu_custom_call.1']
    #allocation8 [shape = 'u8[8192]{0}', space=vmem, size = 0x2000, scoped, tag = 'output window, operand 0']
    %7 = vsyncpa [#allocation4], 0
    %s8 = scalar_lea.sflag [#allocation4], 1
    %9 = vsyncpa %s8, 0
    %10 = vsyncpa [#allocation7], 0
    %11 = vsyncpa [#allocation5], 0
    %s12 = scalar_lea.sflag [#allocation5], 1
    %13 = vsyncpa %s12, 0
    loop: start=0, step=1, limit=4
    $region2: #{tpu_custom_call.1} parent=1 // loop_pre_header
      _
    $region3: #{tpu_custom_call.1} parent=1 // loop_header
      %s15 = sphi 0, %s19
      %p16 = scmp.ge.s32.totalorder %s15, 4
      %s22 = sphi 0, %s41
      %s23 = sphi 0, %s37
      %s24 = sphi 0, %s33
      %s25 = sphi 0, %s22
      %s26 = sphi 0, %s23
      %s27 = sphi 0, %s24
      %s28 = sphi 0, %s25
      %s29 = sphi 0, %s26
      %s30 = sphi 0, %s27
      %s46 = sphi 0, %s48
      %s49 = sphi 0, %s46
      %s50 = sphi 0, %s49
      %s66 = sphi 0, %s50
      %s74 = sphi 0, %s76
      %s77 = sphi 0, %s74
      %s78 = sphi 0, %s77
      %s94 = sphi 0, %s78
      %s102 = sphi 0, %s104
      %s105 = sphi 0, %s102
      %s106 = sphi 0, %s105
      %s122 = sphi 0, %s106
    $region4: #{tpu_custom_call.1} parent=1 // loop_header_branch
      %18 = sbr.rel (%p16) target = $region8
    $region5: #{tpu_custom_call.1} parent=1 // loop_body
      %s20 = ssub.s32 %s15, 1
      %s21 = ssub.s32 %s15, 2
      %s31 = sadd.s32 1, %s24
      %p32 = scmp.ge.s32.totalorder %s31, 1
      %s33 = scalar_select %p32, 0, %s31
      %s34 = sadd.s32 1, %s23
      %s35 = scalar_select %p32, %s34, %s23
      %p36 = scmp.ge.s32.totalorder %s35, 1
      %s37 = scalar_select %p36, 0, %s35
      %s38 = sadd.s32 1, %s22
      %s39 = scalar_select %p36, %s38, %s22
      %p40 = scmp.ge.s32.totalorder %s39, 2
      %s41 = scalar_select %p40, 0, %s39
      %s42 = ssub.s32 %s22, %s41
      %s43 = ssub.s32 %s24, %s33
      %s44 = sor.u32 %s42, %s43
      %p45 = scmp.eq.s32.totalorder %s44, 0
      %s47 = sadd.s32 %s46, 1
      %s48 = scalar_select %p45, %s46, %s47
      %p51 = pneg %p45
      %p52 = scmp.eq.s32.totalorder %s15, 1
      %p53 = por %p51, %p52
      %p54 = scmp.ne.s32.totalorder %s46, %s49
      %p55 = scmp.eq.s32.totalorder %s15, 0
      %p56 = por %p54, %p55
      %p57 = scmp.ne.s32.totalorder %s46, %s49
      %p58 = scmp.eq.s32.totalorder %s20, 1
      %p59 = por %p57, %p58
      %p60 = scmp.ne.s32.totalorder %s49, %s50
      %p61 = scmp.eq.s32.totalorder %s20, 0
      %p62 = por %p60, %p61
      %p63 = scmp.ne.s32.totalorder %s49, %s50
      %p64 = scmp.eq.s32.totalorder %s21, 1
      %p65 = por %p63, %p64
      %p67 = scmp.ne.s32.totalorder %s50, %s66
      %p68 = scmp.eq.s32.totalorder %s21, 0
      %p69 = por %p67, %p68
      %s70 = ssub.s32 %s24, %s33
      %s71 = ssub.s32 %s23, %s37
      %s72 = sor.u32 %s70, %s71
      %p73 = scmp.eq.s32.totalorder %s72, 0
      %s75 = sadd.s32 %s74, 1
      %s76 = scalar_select %p73, %s74, %s75
      %p79 = pneg %p73
      %p80 = scmp.eq.s32.totalorder %s15, 1
      %p81 = por %p79, %p80
      %p82 = scmp.ne.s32.totalorder %s74, %s77
      %p83 = scmp.eq.s32.totalorder %s15, 0
      %p84 = por %p82, %p83
      %p85 = scmp.ne.s32.totalorder %s74, %s77
      %p86 = scmp.eq.s32.totalorder %s20, 1
      %p87 = por %p85, %p86
      %p88 = scmp.ne.s32.totalorder %s77, %s78
      %p89 = scmp.eq.s32.totalorder %s20, 0
      %p90 = por %p88, %p89
      %p91 = scmp.ne.s32.totalorder %s77, %s78
      %p92 = scmp.eq.s32.totalorder %s21, 1
      %p93 = por %p91, %p92
      %p95 = scmp.ne.s32.totalorder %s78, %s94
      %p96 = scmp.eq.s32.totalorder %s21, 0
      %p97 = por %p95, %p96
      %s98 = ssub.s32 %s22, %s41
      %s99 = ssub.s32 %s23, %s37
      %s100 = sor.u32 %s98, %s99
      %p101 = scmp.eq.s32.totalorder %s100, 0
      %s103 = sadd.s32 %s102, 1
      %s104 = scalar_select %p101, %s102, %s103
      %p107 = pneg %p101
      %p108 = scmp.eq.s32.totalorder %s15, 1
      %p109 = por %p107, %p108
      %p110 = scmp.ne.s32.totalorder %s102, %s105
      %p111 = scmp.eq.s32.totalorder %s15, 0
      %p112 = por %p110, %p111
      %p113 = scmp.ne.s32.totalorder %s102, %s105
      %p114 = scmp.eq.s32.totalorder %s20, 1
      %p115 = por %p113, %p114
      %p116 = scmp.ne.s32.totalorder %s105, %s106
      %p117 = scmp.eq.s32.totalorder %s20, 0
      %p118 = por %p116, %p117
      %p119 = scmp.ne.s32.totalorder %s105, %s106
      %p120 = scmp.eq.s32.totalorder %s21, 1
      %p121 = por %p119, %p120
      %p123 = scmp.ne.s32.totalorder %s106, %s122
      %p124 = scmp.eq.s32.totalorder %s21, 0
      %p125 = por %p123, %p124
      %p126 = scmp.le.s32.totalorder 1, %s15
      %p127 = scmp.lt.s32.totalorder %s15, 3
      %p128 = pnand %p126, %p127
      %p129 = pneg %p128
      // Predicated region
      $region9: #{tpu_custom_call.1} parent=5 // pred_check
        _
      $region10: #{tpu_custom_call.1} parent=5 // pred_check_branch
        %131 = sbr.rel (%p128) target = $region12
      $region11: #{tpu_custom_call.1} parent=5 // pred_region
        %s132 = ssub.s32 %s15, 1
        // Predicated region
        $region13: #{tpu_custom_call.1} parent=11 // pred_check
          %p133 = pneg %p90
        $region14: #{tpu_custom_call.1} parent=11 // pred_check_branch
          %135 = sbr.rel (%p133) target = $region16
        $region15: #{tpu_custom_call.1} parent=11 // pred_region
          %s136 = smul.u32 16, %s27
          %s138 = ssub.s32 2048, 2048
          %139 = vsyncadd [#allocation7], %s138
          %s140 = sadd.s32 %s26, %s136
          %s141 = smul.addr %s140, 128
          %s142 = scalar_lea.hbm %s1, %s141
          %s143 = sshll.u32 [#allocation6], 4
          %s144 = int_to_ptr.vmem [resolvable:$true] %s143
          %149 = dma.hbm_to_vmem [thread:$0]  %s142, 2048, %s144, [#allocation7], 128, 128, 8
        $region16: #{tpu_custom_call.1} parent=11 // pred_fallthru
          _
      $region12: #{tpu_custom_call.1} parent=5 // pred_fallthru
        _
      %p150 = scmp.lt.s32.totalorder %s15, 2
      // Predicated region
      $region17: #{tpu_custom_call.1} parent=5 // pred_check
        %p151 = pneg %p150
      $region18: #{tpu_custom_call.1} parent=5 // pred_check_branch
        %153 = sbr.rel (%p151) target = $region20
      $region19: #{tpu_custom_call.1} parent=5 // pred_region
        // Predicated region
        $region21: #{tpu_custom_call.1} parent=19 // pred_check
          %p154 = pneg %p56
        $region22: #{tpu_custom_call.1} parent=19 // pred_check_branch
          %156 = sbr.rel (%p154) target = $region24
        $region23: #{tpu_custom_call.1} parent=19 // pred_region
          %s157 = sand.u32 %s46, 1
          %s158 = scalar_lea.sflag [#allocation4], %s157
          %s159 = sand.u32 %s46, 1
          %s160 = smul.addr %s159, 8
          %s161 = scalar_lea.vmem [#allocation3], %s160
          %s163 = ssub.s32 128, 128
          %164 = vsyncadd %s158, %s163
          %s165 = sadd.s32 %s24, %s22
          %s166 = smul.addr %s165, 128
          %s167 = scalar_lea.hbm %s0, %s166
          %s169 = sshll.u32 %s161, 4
          %s170 = int_to_ptr.vmem [resolvable:$true] %s169
          %172 = dma.hbm_to_vmem [thread:$0]  %s167, 128, %s170, %s158
        $region24: #{tpu_custom_call.1} parent=19 // pred_fallthru
          _
      $region20: #{tpu_custom_call.1} parent=5 // pred_fallthru
        _
      %p173 = scmp.le.s32.totalorder 1, %s15
      %p174 = scmp.lt.s32.totalorder %s15, 3
      %p175 = pnand %p173, %p174
      %p176 = pneg %p175
      // Predicated region
      $region25: #{tpu_custom_call.1} parent=5 // pred_check
        _
      $region26: #{tpu_custom_call.1} parent=5 // pred_check_branch
        %178 = sbr.rel (%p175) target = $region28
      $region27: #{tpu_custom_call.1} parent=5 // pred_region
        %s179 = ssub.s32 %s15, 1
        %s180 = sand.u32 %s49, 1
        %s181 = scalar_lea.sflag [#allocation4], %s180
        %s182 = sand.u32 %s49, 1
        %s183 = smul.addr %s182, 8
        %s184 = scalar_lea.vmem [#allocation3], %s183
        // Predicated region
        $region29: #{tpu_custom_call.1} parent=27 // pred_check
          %p185 = pneg %p62
        $region30: #{tpu_custom_call.1} parent=27 // pred_check_branch
          %187 = sbr.rel (%p185) target = $region32
        $region31: #{tpu_custom_call.1} parent=27 // pred_region
          %188 = dma.done %s181, 128
        $region32: #{tpu_custom_call.1} parent=27 // pred_fallthru
          _
        // Predicated region
        $region33: #{tpu_custom_call.1} parent=27 // pred_check
          %p189 = pneg %p90
        $region34: #{tpu_custom_call.1} parent=27 // pred_check_branch
          %191 = sbr.rel (%p189) target = $region36
        $region35: #{tpu_custom_call.1} parent=27 // pred_region
          %192 = dma.done [#allocation7], 2048
        $region36: #{tpu_custom_call.1} parent=27 // pred_fallthru
          _
        %s193 = sand.u32 %s49, 1
        %s194 = scalar_lea.sflag [#allocation4], %s193
        %s195 = sand.u32 %s49, 1
        %s196 = smul.addr %s195, 8
        %s197 = scalar_lea.vmem [#allocation3], %s196
        %p198 = pneg %p62
        %p199 = pneg %p59
        %p200 = pneg %p90
        %p201 = pneg %p87
        %p202 = pneg %p118
        %p203 = pneg %p115
        %s204 = sand.u32 %s105, 1
        %s205 = scalar_lea.sflag [#allocation5], %s204
        %s206 = sand.u32 %s105, 1
        %s207 = smul.addr %s206, 8
        %s208 = scalar_lea.vmem [#allocation8], %s207
        %s209 = smul.u32 16, %s27
        %p210 = scmp.eq.s32.totalorder %s27, 0
        // Predicated region
        $region37: #{tpu_custom_call.1} parent=27 // pred_check
          %p211 = pneg %p210
        $region38: #{tpu_custom_call.1} parent=27 // pred_check_branch
          %213 = sbr.rel (%p211) target = $region40
        $region39: #{tpu_custom_call.1} parent=27 // pred_region
          %214 = vst [vmem:[#allocation2] sm:$0xff] 0.0
        $region40: #{tpu_custom_call.1} parent=27 // pred_fallthru
          _
        %v215 = vld [vmem:[#allocation2] sm:$0xff]
        %v216 = vld [vmem:[%s184] sm:$0xff]
        %v217 = vld [vmem:[#allocation6] sm:$0xff]
        %v218 = vld [vmem:[#allocation6 + $0x8] sm:$0xff]
        %v219 = vld [vmem:[#allocation6 + $0x10] sm:$0xff]
        %v220 = vld [vmem:[#allocation6 + $0x18] sm:$0xff]
        %v221 = vld [vmem:[#allocation6 + $0x20] sm:$0xff]
        %v222 = vld [vmem:[#allocation6 + $0x28] sm:$0xff]
        %v223 = vld [vmem:[#allocation6 + $0x30] sm:$0xff]
        %v224 = vld [vmem:[#allocation6 + $0x38] sm:$0xff]
        %v225 = vld [vmem:[#allocation6 + $0x40] sm:$0xff]
        %v226 = vld [vmem:[#allocation6 + $0x48] sm:$0xff]
        %v227 = vld [vmem:[#allocation6 + $0x50] sm:$0xff]
        %v228 = vld [vmem:[#allocation6 + $0x58] sm:$0xff]
        %v229 = vld [vmem:[#allocation6 + $0x60] sm:$0xff]
        %v230 = vld [vmem:[#allocation6 + $0x68] sm:$0xff]
        %v231 = vld [vmem:[#allocation6 + $0x70] sm:$0xff]
        %v232 = vld [vmem:[#allocation6 + $0x78] sm:$0xff]
        %233 = vmatprep.subr.mxu0 0.0
        %234 = vmatpush1.msra.mxu0 %v217
        %235 = vmatprep.subr.mxu0 0.0
        %236 = vmatpush1.msra.mxu0 %v218
        %237 = vmatprep.subr.mxu0 0.0
        %238 = vmatpush1.msra.mxu0 %v219
        %239 = vmatprep.subr.mxu0 0.0
        %240 = vmatpush1.msra.mxu0 %v220
        %241 = vmatprep.subr.mxu0 0.0
        %242 = vmatpush1.msra.mxu0 %v221
        %243 = vmatprep.subr.mxu0 0.0
        %244 = vmatpush1.msra.mxu0 %v222
        %245 = vmatprep.subr.mxu0 0.0
        %246 = vmatpush1.msra.mxu0 %v223
        %247 = vmatprep.subr.mxu0 0.0
        %248 = vmatpush1.msra.mxu0 %v224
        %249 = vmatprep.subr.mxu0 0.0
        %250 = vmatpush1.msra.mxu0 %v225
        %251 = vmatprep.subr.mxu0 0.0
        %252 = vmatpush1.msra.mxu0 %v226
        %253 = vmatprep.subr.mxu0 0.0
        %254 = vmatpush1.msra.mxu0 %v227
        %255 = vmatprep.subr.mxu0 0.0
        %256 = vmatpush1.msra.mxu0 %v228
        %257 = vmatprep.subr.mxu0 0.0
        %258 = vmatpush1.msra.mxu0 %v229
        %259 = vmatprep.subr.mxu0 0.0
        %260 = vmatpush1.msra.mxu0 %v230
        %261 = vmatprep.subr.mxu0 0.0
        %262 = vmatpush1.msra.mxu0 %v231
        %263 = vmatprep.subr.mxu0 0.0
        %264 = vmatpush1.msra.mxu0 %v232
        %265 = vmatprep.subr.mxu0 0.0
        %266 = vmatpush1.msra.mxu0 0.0
        %267 = vmatprep.subr.mxu0 0.0
        %268 = vmatpush1.msra.mxu0 0.0
        %269 = vmatprep.subr.mxu0 0.0
        %270 = vmatpush1.msra.mxu0 0.0
        %271 = vmatprep.subr.mxu0 0.0
        %272 = vmatpush1.msra.mxu0 0.0
        %273 = vmatprep.subr.mxu0 0.0
        %274 = vmatpush1.msra.mxu0 0.0
        %275 = vmatprep.subr.mxu0 0.0
        %276 = vmatpush1.msra.mxu0 0.0
        %277 = vmatprep.subr.mxu0 0.0
        %278 = vmatpush1.msra.mxu0 0.0
        %279 = vmatprep.subr.mxu0 0.0
        %280 = vmatpush1.msra.mxu0 0.0
        %281 = vmatprep.subr.mxu0 0.0
        %282 = vmatpush1.msra.mxu0 0.0
        %283 = vmatprep.subr.mxu0 0.0
        %284 = vmatpush1.msra.mxu0 0.0
        %285 = vmatprep.subr.mxu0 0.0
        %286 = vmatpush1.msra.mxu0 0.0
        %287 = vmatprep.subr.mxu0 0.0
        %288 = vmatpush1.msra.mxu0 0.0
        %289 = vmatprep.subr.mxu0 0.0
        %290 = vmatpush1.msra.mxu0 0.0
        %291 = vmatprep.subr.mxu0 0.0
        %292 = vmatpush1.msra.mxu0 0.0
        %293 = vmatprep.subr.mxu0 0.0
        %294 = vmatpush1.msra.mxu0 0.0
        %295 = vmatprep.subr.mxu0 0.0
        %296 = vmatpush1.msra.mxu0 0.0
        %297 = vmatprep.mubr.f32.mxu0 0.0
        %298 = vmatmul.mubr.f32.gmra.mrb[0].mxu0 %v216
        %v299 = vpop.f32.mrb[0].mxu0
        %v300 = vadd.f32 0.0, %v299
        %v301 = vpop.f32.mrb[0].mxu0
        %302 = vdwg.mxu0
        %v303 = vadd.f32 %v215, %v300
        %304 = vst [vmem:[#allocation2] sm:$0xff] %v303
        // Predicated region
        $region41: #{tpu_custom_call.1} parent=27 // pred_check
          %p305 = pneg %p210
        $region42: #{tpu_custom_call.1} parent=27 // pred_check_branch
          %307 = sbr.rel (%p305) target = $region44
        $region43: #{tpu_custom_call.1} parent=27 // pred_region
          %v308 = vld [vmem:[#allocation2] sm:$0xff]
          %309 = vst [vmem:[%s208] sm:$0xff] %v308
        $region44: #{tpu_custom_call.1} parent=27 // pred_fallthru
          _
        %s310 = sand.u32 %s105, 1
        %s311 = scalar_lea.sflag [#allocation5], %s310
        %s312 = sand.u32 %s105, 1
        %s313 = smul.addr %s312, 8
        %s314 = scalar_lea.vmem [#allocation8], %s313
        // Predicated region
        $region45: #{tpu_custom_call.1} parent=27 // pred_check
          %p315 = pneg %p115
        $region46: #{tpu_custom_call.1} parent=27 // pred_check_branch
          %317 = sbr.rel (%p315) target = $region48
        $region47: #{tpu_custom_call.1} parent=27 // pred_region
          %s319 = ssub.s32 128, 128
          %320 = vsyncadd %s311, %s319
          %s321 = sadd.s32 %s26, %s25
          %s322 = smul.addr %s321, 128
          %s323 = scalar_lea.hbm %s2, %s322
          %s325 = sshll.u32 %s314, 4
          %s326 = int_to_ptr.vmem [resolvable:$true] %s325
          %328 = dma.vmem_to_hbm [thread:$0]  %s326, 128, %s323, %s311
        $region48: #{tpu_custom_call.1} parent=27 // pred_fallthru
          _
      $region28: #{tpu_custom_call.1} parent=5 // pred_fallthru
        _
      %p329 = scmp.le.s32.totalorder 2, %s15
      // Predicated region
      $region49: #{tpu_custom_call.1} parent=5 // pred_check
        %p330 = pneg %p329
      $region50: #{tpu_custom_call.1} parent=5 // pred_check_branch
        %332 = sbr.rel (%p330) target = $region52
      $region51: #{tpu_custom_call.1} parent=5 // pred_region
        %s333 = ssub.s32 %s15, 2
        // Predicated region
        $region53: #{tpu_custom_call.1} parent=51 // pred_check
          %p334 = pneg %p121
        $region54: #{tpu_custom_call.1} parent=51 // pred_check_branch
          %336 = sbr.rel (%p334) target = $region56
        $region55: #{tpu_custom_call.1} parent=51 // pred_region
          %s337 = sand.u32 %s106, 1
          %s338 = scalar_lea.sflag [#allocation5], %s337
          %s339 = sand.u32 %s106, 1
          %s340 = smul.addr %s339, 8
          %s341 = scalar_lea.vmem [#allocation8], %s340
          %342 = dma.done %s338, 128
        $region56: #{tpu_custom_call.1} parent=51 // pred_fallthru
          _
      $region52: #{tpu_custom_call.1} parent=5 // pred_fallthru
        _
    $region6: #{tpu_custom_call.1} parent=1 // loop_footer
      %s19 = sadd.s32 1, %s15
    $region7: #{tpu_custom_call.1} parent=1 // loop_footer_branch
      %14 = sbr.rel target = $region3
    $region8: #{tpu_custom_call.1} parent=1 // loop_exit
      _
    %343 = vsyncpa [#allocation4], 1
    %s344 = scalar_lea.sflag [#allocation4], 1
    %345 = vsyncpa %s344, 1
    %346 = vsyncpa [#allocation7], 1
    %347 = vsyncpa [#allocation5], 1
    %s348 = scalar_lea.sflag [#allocation5], 1
    %349 = vsyncpa %s348, 1

</llo_original>
